<compile_context>
chip_gen: v5e
topology: v5e:2x2
jax: 0.10.0
libtpu: 0.0.40
codegen_flags: <defaults>
</compile_context>

<pallas_src>
import jax
import jax.numpy as jnp
from jax.experimental import pallas as pl
from jax.experimental.pallas import tpu as pltpu


def _round_up(n, m):
    return ((n + m - 1) // m) * m


def _resident_spec(block_shape, index_map):
    """BlockSpec for a VMEM-resident block (constant index_map): 1 buffer."""
    if hasattr(pl, "Buffered"):
        return pl.BlockSpec(block_shape, index_map, pipeline_mode=pl.Buffered(1))
    return pl.BlockSpec(block_shape, index_map)


def actor_loc_kernel(x_ref, w_ref, b_ref, loc_ref):
    # (TB, F) @ (F, A) on the MXU with fp32 accumulation, then bias row
    # broadcast over the batch tile.  Output block is lane-narrow (A=8) by
    # design: the binding resource here is HBM traffic, not the vst slot.
    acc = jnp.dot(x_ref[...], w_ref[...], preferred_element_type=jnp.float32)
    loc_ref[...] = (acc + b_ref[...]).astype(loc_ref.dtype)


def actor_forward(features, weight, bias, actor_std, *, block_b=2048,
                  min_pallas_batch=1024, expand_scale=True):
    """features: (B, F); weight: (F, A) (pre-transposed); bias, actor_std: (A,).

    Returns (loc, scale) matching PyTorch Actor.forward.  If expand_scale is
    False, scale is returned as shape (A,) and left to the consumer to
    broadcast (avoids materializing a loc-sized constant array).
    """
    B, F = features.shape
    A = weight.shape[1]
    out_dtype = features.dtype

    scale_vec = jnp.exp(actor_std).astype(out_dtype)
    scale = jnp.broadcast_to(scale_vec, (B, A)) if expand_scale else scale_vec

    # Small-batch fallback: XLA's fused GEMM+bias beats the pallas_call fixed
    # overhead at the module's native tiny shapes (B=8, F=32, A=8).
    if B < min_pallas_batch:
        loc = (features @ weight.astype(features.dtype)
               + bias.astype(features.dtype)).astype(out_dtype)
        return loc, scale

    itm_in = jnp.dtype(features.dtype).itemsize
    itm_out = jnp.dtype(out_dtype).itemsize
    sub = 16 if itm_in <= 2 else 8  # bf16 packs 2 rows/sublane

    # Batch tile: as large as block_b allows, but always >= 2 tiles so v7x's
    # two TensorCores both get work.  No wrapper-side padding of features:
    # Pallas handles the ragged last block (OOB writes dropped).
    n_tiles = max(2, pl.cdiv(B, block_b))
    TB = min(_round_up(block_b, sub), _round_up(pl.cdiv(B, n_tiles), sub))
    TB = max(TB, sub)

    # Per-generation VMEM budget: 3/4 of physical capacity (64 MiB/TC on v7x,
    # 128 MiB on v5e/v6e).  Shrink TB instead of over-requesting the limit.
    try:
        phys_vmem = int(pltpu.get_tpu_info().vmem_capacity_bytes)
    except Exception:  # info unavailable: assume the smallest (v7x per-TC)
        phys_vmem = 64 * 1024 * 1024
    budget = (phys_vmem * 3) // 4

    def _footprint(tb):
        return (2 * tb * F * itm_in        # x tiles, double-buffered
                + 2 * F * A * itm_in       # weight (conservative 2 bufs)
                + 2 * A * 4                # bias
                + 2 * tb * A * itm_out)    # loc tiles, double-buffered

    while TB > sub and _footprint(TB) > budget:
        TB = max(sub, _round_up(TB // 2, sub))

    grid = (pl.cdiv(B, TB),)

    cp_kwargs = dict(dimension_semantics=("parallel",))
    vmem_est = _footprint(TB)
    # v5e's scoped default is only 16 MiB; raise the limit explicitly whenever
    # we might exceed it, clamped to the physical budget.
    if vmem_est > 12 * 1024 * 1024:
        cp_kwargs["vmem_limit_bytes"] = int(min(budget, vmem_est + (8 << 20)))

    cost = pl.CostEstimate(
        flops=2 * B * F * A,
        transcendentals=0,
        bytes_accessed=(B * F * itm_in + F * A * itm_in + A * 4
                        + B * A * itm_out),
    )

    w = weight.astype(features.dtype)               # (F, A), tiny cast
    b2 = bias.reshape(1, A).astype(jnp.float32)     # (1, A)

    loc = pl.pallas_call(
        actor_loc_kernel,
        out_shape=jax.ShapeDtypeStruct((B, A), out_dtype),
        grid=grid,
        in_specs=[
            pl.BlockSpec((TB, F), lambda i: (i, 0)),     # batch tile
            _resident_spec((F, A), lambda i: (0, 0)),    # weight, resident
            _resident_spec((1, A), lambda i: (0, 0)),    # bias, resident
        ],
        out_specs=pl.BlockSpec((TB, A), lambda i: (i, 0)),
        compiler_params=pltpu.CompilerParams(**cp_kwargs),
        cost_estimate=cost,
    )(features, w, b2)

    return loc, scale


if __name__ == "__main__":
    key = jax.random.PRNGKey(0)
    k_x, k_w, k_b, k_x2 = jax.random.split(key, 4)

    F, A = 32, 8
    # Deterministic params (mimic nn.Linear uniform(-1/sqrt(F), 1/sqrt(F))).
    bound = 1.0 / jnp.sqrt(jnp.float32(F))
    weight = jax.random.uniform(k_w, (F, A), minval=-bound, maxval=bound,
                                dtype=jnp.float32)
    bias = jax.random.uniform(k_b, (A,), minval=-bound, maxval=bound,
                              dtype=jnp.float32)
    actor_std = jnp.zeros((A,), dtype=jnp.float32)  # nn.Parameter(torch.zeros(A))

    # 1) Module-native tiny batch: exercises the small-B XLA fallback path.
    B_small = 8
    x_small = jax.random.normal(k_x, (B_small, F), dtype=jnp.float32)
    loc_s, scale_s = actor_forward(x_small, weight, bias, actor_std)
    jax.block_until_ready((loc_s, scale_s))
    ref_s = x_small @ weight + bias
    assert loc_s.shape == (B_small, A) and scale_s.shape == (B_small, A)
    assert jnp.allclose(loc_s, ref_s, atol=1e-5), "small-B loc mismatch"
    assert jnp.allclose(scale_s, jnp.exp(actor_std)[None, :].repeat(B_small, 0),
                        atol=1e-6), "small-B scale mismatch"

    # 2) Larger (still small) ragged batch: forces the Pallas path, 2-tile
    #    grid with a masked last block (no wrapper-side padding).
    B_big = 200
    x_big = jax.random.normal(k_x2, (B_big, F), dtype=jnp.float32)
    loc_b, scale_b = actor_forward(x_big, weight, bias, actor_std,
                                   min_pallas_batch=0)
    jax.block_until_ready((loc_b, scale_b))
    ref_b = x_big @ weight + bias
    assert loc_b.shape == (B_big, A) and scale_b.shape == (B_big, A)
    assert jnp.allclose(loc_b, ref_b, atol=1e-5), "pallas loc mismatch"
    assert jnp.allclose(scale_b, jnp.broadcast_to(jnp.exp(actor_std), (B_big, A)),
                        atol=1e-6), "pallas scale mismatch"

    print("KERNEL_OK")
</pallas_src>

<mosaic_0001>
module attributes {stable_mosaic.version = 11 : i64} {
  func.func @actor_loc_kernel(%arg0: i32, %arg1: memref<104x32xf32, #tpu.memory_space<vmem>>, %arg2: memref<32x8xf32, #tpu.memory_space<vmem>>, %arg3: memref<1x8xf32, #tpu.memory_space<vmem>>, %arg4: memref<104x8xf32, #tpu.memory_space<vmem>>) attributes {dimension_semantics = [#tpu.dimension_semantics<parallel>], iteration_bounds = array<i64: 2>, scalar_prefetch = 0 : i64, scratch_operands = 0 : i64, tpu.core_type = #tpu.core_type<tc>, window_params = [{transform_indices = @transform_0, window_bounds = array<i64: 104, 32>}, {pipeline_mode = #tpu.pipeline_mode<synchronous>, transform_indices = @transform_1, window_bounds = array<i64: 32, 8>}, {pipeline_mode = #tpu.pipeline_mode<synchronous>, transform_indices = @transform_2, window_bounds = array<i64: 1, 8>}, {transform_indices = @transform_3, window_bounds = array<i64: 104, 8>}]} {
    %c0 = arith.constant 0 : index
    %c0_0 = arith.constant 0 : index
    %0 = vector.load %arg1[%c0, %c0_0] : memref<104x32xf32, #tpu.memory_space<vmem>>, vector<104x32xf32>
    %c0_1 = arith.constant 0 : index
    %c0_2 = arith.constant 0 : index
    %1 = vector.load %arg2[%c0_1, %c0_2] : memref<32x8xf32, #tpu.memory_space<vmem>>, vector<32x8xf32>
    %cst = arith.constant dense<0.000000e+00> : vector<104x8xf32>
    %2 = tpu.matmul %0, %1, %cst {dimension_numbers = #tpu.dot_dimension_numbers<[1], [0], [0], [1], [0, 0, 1, 1], [], []>} : vector<104x32xf32>, vector<32x8xf32>, vector<104x8xf32> -> vector<104x8xf32>
    %c0_3 = arith.constant 0 : index
    %c0_4 = arith.constant 0 : index
    %3 = vector.load %arg3[%c0_3, %c0_4] : memref<1x8xf32, #tpu.memory_space<vmem>>, vector<1x8xf32>
    %4 = vector.broadcast %3 : vector<1x8xf32> to vector<104x8xf32>
    %5 = arith.addf %2, %4 : vector<104x8xf32>
    %c0_5 = arith.constant 0 : index
    %c0_6 = arith.constant 0 : index
    %6 = vector.load %arg4[%c0_5, %c0_6] : memref<104x8xf32, #tpu.memory_space<vmem>>, vector<104x8xf32>
    tpu.vector_store %arg4[%c0_5, %c0_6], %5 {strides = array<i32>} : memref<104x8xf32, #tpu.memory_space<vmem>>, vector<104x8xf32>,
    return
  }
  func.func @transform_0(%arg0: i32) -> (i32, i32) {
    %c0_i32 = arith.constant 0 : i32
    %c0_i32_0 = arith.constant 0 : i32
    return %arg0, %c0_i32 : i32, i32
  }
  func.func @transform_1(%arg0: i32) -> (i32, i32) {
    %c0_i32 = arith.constant 0 : i32
    %c0_i32_0 = arith.constant 0 : i32
    %c0_i32_1 = arith.constant 0 : i32
    return %c0_i32, %c0_i32_0 : i32, i32
  }
  func.func @transform_2(%arg0: i32) -> (i32, i32) {
    %c0_i32 = arith.constant 0 : i32
    %c0_i32_0 = arith.constant 0 : i32
    %c0_i32_1 = arith.constant 0 : i32
    return %c0_i32, %c0_i32_0 : i32, i32
  }
  func.func @transform_3(%arg0: i32) -> (i32, i32) {
    %c0_i32 = arith.constant 0 : i32
    %c0_i32_0 = arith.constant 0 : i32
    return %arg0, %c0_i32 : i32, i32
  }
}

</mosaic_0001>

<llo_original>
// kernel: tpu_custom_call.1
$region0: #{tpu_custom_call.1}
  #allocation0 [shape = 'u32[]', space=smem, size = 0x4, offset = 0x4, fixed_abs, tag = 'smem constant byte address 0x4 - core index']
  #allocation1 [shape = 'u32[72,128]{1,0:T(1,128)}', space=vmem, size = 0x9000, scoped, tag = 'internal scratch']
  %s0 = inlined_call_operand.vmem [shape: f32[200,32], index: 0, kind: input, shape index: {}]
  %s1 = inlined_call_operand.vmem [shape: f32[32,8], index: 1, kind: input, shape index: {}]
  %s2 = inlined_call_operand.vmem [shape: f32[1,8], index: 2, kind: input, shape index: {}]
  %s3 = inlined_call_operand.vmem [shape: f32[200,8], index: 3, kind: output, shape index: {}]
  %s4 = sld [smem:[#allocation0]]
  $region93: #{tpu_custom_call.1} parent=0
    _
  %s6 = ssub.s32 1, %s4
  %s7 = scalar_select 0, %s6, %s4
  $region1: #{tpu_custom_call.1} parent=0
    #allocation2 [shape = 'u8[106496]{0}', space=vmem, size = 0x1a000, scoped, tag = 'output window, operand 0']
    loop: start=0, step=1, limit=4
    $region2: #{tpu_custom_call.1} parent=1 // loop_pre_header
      _
    $region3: #{tpu_custom_call.1} parent=1 // loop_header
      %s9 = sphi 0, %s13
      %p10 = scmp.ge.s32.totalorder %s9, 4
      %s19 = sphi 0, %s21
      %s22 = sphi 0, %s19
      %s23 = sphi 0, %s22
      %s39 = sphi 0, %s23
      %s43 = sphi 0, %s43
      %s45 = sphi 0, %s43
      %s46 = sphi 0, %s45
      %s60 = sphi 0, %s46
      %s64 = sphi 0, %s64
      %s66 = sphi 0, %s64
      %s67 = sphi 0, %s66
      %s81 = sphi 0, %s67
      %s87 = sphi 0, %s89
      %s90 = sphi 0, %s87
      %s91 = sphi 0, %s90
      %s107 = sphi 0, %s91
    $region4: #{tpu_custom_call.1} parent=1 // loop_header_branch
      %12 = sbr.rel (%p10) target = $region8
    $region5: #{tpu_custom_call.1} parent=1 // loop_body
      %s14 = ssub.s32 %s9, 1
      %s15 = ssub.s32 %s9, 2
      %s16 = sadd.s32 %s9, 1
      %s17 = ssub.s32 %s9, %s16
      %p18 = scmp.eq.s32.totalorder %s17, 0
      %s20 = sadd.s32 %s19, 1
      %s21 = scalar_select %p18, %s19, %s20
      %p24 = pneg %p18
      %p25 = scmp.eq.s32.totalorder %s9, 1
      %p26 = por %p24, %p25
      %p27 = scmp.ne.s32.totalorder %s19, %s22
      %p28 = scmp.eq.s32.totalorder %s9, 0
      %p29 = por %p27, %p28
      %p30 = scmp.ne.s32.totalorder %s19, %s22
      %p31 = scmp.eq.s32.totalorder %s14, 1
      %p32 = por %p30, %p31
      %p33 = scmp.ne.s32.totalorder %s22, %s23
      %p34 = scmp.eq.s32.totalorder %s14, 0
      %p35 = por %p33, %p34
      %p36 = scmp.ne.s32.totalorder %s22, %s23
      %p37 = scmp.eq.s32.totalorder %s15, 1
      %p38 = por %p36, %p37
      %p40 = scmp.ne.s32.totalorder %s23, %s39
      %p41 = scmp.eq.s32.totalorder %s15, 0
      %p42 = por %p40, %p41
      %s44 = sadd.s32 %s43, 1
      %p47 = scmp.eq.s32.totalorder %s9, 1
      %p48 = scmp.ne.s32.totalorder %s43, %s45
      %p49 = scmp.eq.s32.totalorder %s9, 0
      %p50 = por %p48, %p49
      %p51 = scmp.ne.s32.totalorder %s43, %s45
      %p52 = scmp.eq.s32.totalorder %s14, 1
      %p53 = por %p51, %p52
      %p54 = scmp.ne.s32.totalorder %s45, %s46
      %p55 = scmp.eq.s32.totalorder %s14, 0
      %p56 = por %p54, %p55
      %p57 = scmp.ne.s32.totalorder %s45, %s46
      %p58 = scmp.eq.s32.totalorder %s15, 1
      %p59 = por %p57, %p58
      %p61 = scmp.ne.s32.totalorder %s46, %s60
      %p62 = scmp.eq.s32.totalorder %s15, 0
      %p63 = por %p61, %p62
      %s65 = sadd.s32 %s64, 1
      %p68 = scmp.eq.s32.totalorder %s9, 1
      %p69 = scmp.ne.s32.totalorder %s64, %s66
      %p70 = scmp.eq.s32.totalorder %s9, 0
      %p71 = por %p69, %p70
      %p72 = scmp.ne.s32.totalorder %s64, %s66
      %p73 = scmp.eq.s32.totalorder %s14, 1
      %p74 = por %p72, %p73
      %p75 = scmp.ne.s32.totalorder %s66, %s67
      %p76 = scmp.eq.s32.totalorder %s14, 0
      %p77 = por %p75, %p76
      %p78 = scmp.ne.s32.totalorder %s66, %s67
      %p79 = scmp.eq.s32.totalorder %s15, 1
      %p80 = por %p78, %p79
      %p82 = scmp.ne.s32.totalorder %s67, %s81
      %p83 = scmp.eq.s32.totalorder %s15, 0
      %p84 = por %p82, %p83
      %s85 = ssub.s32 %s9, %s16
      %p86 = scmp.eq.s32.totalorder %s85, 0
      %s88 = sadd.s32 %s87, 1
      %s89 = scalar_select %p86, %s87, %s88
      %p92 = pneg %p86
      %p93 = scmp.eq.s32.totalorder %s9, 1
      %p94 = por %p92, %p93
      %p95 = scmp.ne.s32.totalorder %s87, %s90
      %p96 = scmp.eq.s32.totalorder %s9, 0
      %p97 = por %p95, %p96
      %p98 = scmp.ne.s32.totalorder %s87, %s90
      %p99 = scmp.eq.s32.totalorder %s14, 1
      %p100 = por %p98, %p99
      %p101 = scmp.ne.s32.totalorder %s90, %s91
      %p102 = scmp.eq.s32.totalorder %s14, 0
      %p103 = por %p101, %p102
      %p104 = scmp.ne.s32.totalorder %s90, %s91
      %p105 = scmp.eq.s32.totalorder %s15, 1
      %p106 = por %p104, %p105
      %p108 = scmp.ne.s32.totalorder %s91, %s107
      %p109 = scmp.eq.s32.totalorder %s15, 0
      %p110 = por %p108, %p109
      %p111 = scmp.le.s32.totalorder 1, %s9
      %p112 = scmp.lt.s32.totalorder %s9, 3
      %p113 = pnand %p111, %p112
      %p114 = pneg %p113
      // Predicated region
      $region9: #{tpu_custom_call.1} parent=5 // pred_check
        _
      $region10: #{tpu_custom_call.1} parent=5 // pred_check_branch
        %116 = sbr.rel (%p113) target = $region12
      $region11: #{tpu_custom_call.1} parent=5 // pred_region
        %s117 = ssub.s32 %s9, 1
        // Predicated region
        $region13: #{tpu_custom_call.1} parent=11 // pred_check
          %p118 = pneg %p56
        $region14: #{tpu_custom_call.1} parent=11 // pred_check_branch
          %120 = sbr.rel (%p118) target = $region16
        $region15: #{tpu_custom_call.1} parent=11 // pred_region
          _
        $region16: #{tpu_custom_call.1} parent=11 // pred_fallthru
          _
        // Predicated region
        $region17: #{tpu_custom_call.1} parent=11 // pred_check
          %p121 = pneg %p77
        $region18: #{tpu_custom_call.1} parent=11 // pred_check_branch
          %123 = sbr.rel (%p121) target = $region20
        $region19: #{tpu_custom_call.1} parent=11 // pred_region
          _
        $region20: #{tpu_custom_call.1} parent=11 // pred_fallthru
          _
      $region12: #{tpu_custom_call.1} parent=5 // pred_fallthru
        _
      %p124 = scmp.lt.s32.totalorder %s9, 2
      // Predicated region
      $region21: #{tpu_custom_call.1} parent=5 // pred_check
        %p125 = pneg %p124
      $region22: #{tpu_custom_call.1} parent=5 // pred_check_branch
        %127 = sbr.rel (%p125) target = $region24
      $region23: #{tpu_custom_call.1} parent=5 // pred_region
        // Predicated region
        $region25: #{tpu_custom_call.1} parent=23 // pred_check
          %p128 = pneg %p29
        $region26: #{tpu_custom_call.1} parent=23 // pred_check_branch
          %130 = sbr.rel (%p128) target = $region28
        $region27: #{tpu_custom_call.1} parent=23 // pred_region
          %s131 = smul.u32 13, %s9
          %s132 = ssub.s32 25, %s131
          %p133 = scmp.lt.s32.totalorder %s132, 13
          %s134 = scalar_select %p133, %s132, 13
          %s135 = smul.u32 8, %s134
          %p136 = scmp.lt.s32.totalorder %s131, 24
          %s137 = scalar_select %p136, %s131, 24
          %s138 = smul.addr %s137, 8
          %s139 = scalar_lea.vmem %s0, %s138
          %s140 = smul.u32 13, %s9
          %s141 = ssub.s32 25, %s140
          %p142 = scmp.lt.s32.totalorder %s141, 13
          %s143 = scalar_select %p142, %s141, 13
          %s144 = smul.u32 8, %s143
        $region28: #{tpu_custom_call.1} parent=23 // pred_fallthru
          _
      $region24: #{tpu_custom_call.1} parent=5 // pred_fallthru
        _
      %p145 = scmp.le.s32.totalorder 1, %s9
      %p146 = scmp.lt.s32.totalorder %s9, 3
      %p147 = pnand %p145, %p146
      %p148 = pneg %p147
      // Predicated region
      $region29: #{tpu_custom_call.1} parent=5 // pred_check
        _
      $region30: #{tpu_custom_call.1} parent=5 // pred_check_branch
        %150 = sbr.rel (%p147) target = $region32
      $region31: #{tpu_custom_call.1} parent=5 // pred_region
        %s151 = ssub.s32 %s9, 1
        %s152 = smul.u32 13, %s14
        %s153 = ssub.s32 25, %s152
        %p154 = scmp.lt.s32.totalorder %s153, 13
        %s155 = scalar_select %p154, %s153, 13
        %s156 = smul.u32 8, %s155
        %p157 = scmp.lt.s32.totalorder %s152, 24
        %s158 = scalar_select %p157, %s152, 24
        %s159 = smul.addr %s158, 8
        %s160 = scalar_lea.vmem %s0, %s159
        %p161 = pneg %p35
        %p162 = pneg %p32
        %p163 = pneg %p56
        %p164 = pneg %p53
        %p165 = pneg %p77
        %p166 = pneg %p74
        %p167 = pneg %p103
        %p168 = pneg %p100
        %s169 = sand.u32 %s90, 1
        %s170 = sand.u32 %s90, 1
        %s171 = smul.addr %s170, 104
        %s172 = scalar_lea.vmem [#allocation2], %s171
        %s173 = smul.u32 13, %s14
        %s174 = ssub.s32 25, %s173
        %p175 = scmp.lt.s32.totalorder %s174, 13
        %s176 = scalar_select %p175, %s174, 13
        %s177 = smul.u32 8, %s176
        %p178 = scmp.lt.s32.totalorder %s173, 24
        %s179 = scalar_select %p178, %s173, 24
        %s180 = smul.addr %s179, 8
        %s181 = scalar_lea.vmem %s0, %s180
        %s182 = smul.u32 13, %s14
        %s183 = ssub.s32 25, %s182
        %p184 = scmp.lt.s32.totalorder %s183, 13
        %s185 = scalar_select %p184, %s183, 13
        %s186 = smul.u32 8, %s185
        %s187 = smul.u32 13, %s14
        %s188 = ssub.s32 25, %s187
        %p189 = scmp.lt.s32.totalorder %s188, 13
        %s190 = scalar_select %p189, %s188, 13
        %s191 = smul.u32 8, %s190
        %v192 = vld [vmem:[%s181] sm:$0xff]
        %v193 = vld [vmem:[%s181 + $0x8] sm:$0xff]
        %v194 = vld [vmem:[%s181 + $0x10] sm:$0xff]
        %v195 = vld [vmem:[%s181 + $0x18] sm:$0xff]
        %v196 = vld [vmem:[%s181 + $0x20] sm:$0xff]
        %v197 = vld [vmem:[%s181 + $0x28] sm:$0xff]
        %v198 = vld [vmem:[%s181 + $0x30] sm:$0xff]
        %v199 = vld [vmem:[%s181 + $0x38] sm:$0xff]
        %v200 = vld [vmem:[%s181 + $0x40] sm:$0xff]
        %v201 = vld [vmem:[%s181 + $0x48] sm:$0xff]
        %v202 = vld [vmem:[%s181 + $0x50] sm:$0xff]
        %v203 = vld [vmem:[%s181 + $0x58] sm:$0xff]
        %v204 = vld [vmem:[%s181 + $0x60] sm:$0xff]
        %v205 = vld [vmem:[%s1] sm:$0xff]
        %v206 = vld [vmem:[%s1 + $0x8] sm:$0xff]
        %v207 = vld [vmem:[%s1 + $0x10] sm:$0xff]
        %v208 = vld [vmem:[%s1 + $0x18] sm:$0xff]
        %v209 = vld [vmem:[%s2] sm:$0x1]
        %v211 = vperm.slane %v209, 0
        %vm213 = vcmask 261120
        %v215 = vsel %vm213, %v192, 0
        %v218 = vsel %vm213, %v193, 0
        %v221 = vsel %vm213, %v194, 0
        %v224 = vsel %vm213, %v195, 0
        %v227 = vsel %vm213, %v196, 0
        %v230 = vsel %vm213, %v197, 0
        %v233 = vsel %vm213, %v198, 0
        %v236 = vsel %vm213, %v199, 0
        %v239 = vsel %vm213, %v200, 0
        %v242 = vsel %vm213, %v201, 0
        %v245 = vsel %vm213, %v202, 0
        %v248 = vsel %vm213, %v203, 0
        %v251 = vsel %vm213, %v204, 0
        %253 = vmatpush.msra.mxu0 0.0
        %254 = vmatpush.msra.mxu0 0.0
        %255 = vmatpush.msra.mxu0 0.0
        %256 = vmatpush.msra.mxu0 0.0
        %257 = vmatpush.msra.mxu0 0.0
        %258 = vmatpush.msra.mxu0 0.0
        %259 = vmatpush.msra.mxu0 0.0
        %260 = vmatpush.msra.mxu0 0.0
        %261 = vmatpush.msra.mxu0 0.0
        %262 = vmatpush.msra.mxu0 0.0
        %263 = vmatpush.msra.mxu0 0.0
        %264 = vmatpush.msra.mxu0 0.0
        %265 = vmatpush.msra.mxu0 %v208
        %266 = vmatpush.msra.mxu0 %v207
        %267 = vmatpush.msra.mxu0 %v206
        %268 = vmatpush.msra.mxu0 %v205
        %269 = vmatmul.f32.gmra.mxu0 %v215
        %v270 = vpop.f32.mrf.mxu0
        %v271 = vadd.f32 %v211, %v270
        %272 = vmatmul.f32.gmra.mxu0 %v218
        %v273 = vpop.f32.mrf.mxu0
        %v274 = vadd.f32 %v211, %v273
        %275 = vmatmul.f32.gmra.mxu0 %v221
        %v276 = vpop.f32.mrf.mxu0
        %v277 = vadd.f32 %v211, %v276
        %278 = vmatmul.f32.gmra.mxu0 %v224
        %v279 = vpop.f32.mrf.mxu0
        %v280 = vadd.f32 %v211, %v279
        %281 = vmatmul.f32.gmra.mxu0 %v227
        %v282 = vpop.f32.mrf.mxu0
        %v283 = vadd.f32 %v211, %v282
        %284 = vmatmul.f32.gmra.mxu0 %v230
        %v285 = vpop.f32.mrf.mxu0
        %v286 = vadd.f32 %v211, %v285
        %287 = vmatmul.f32.gmra.mxu0 %v233
        %v288 = vpop.f32.mrf.mxu0
        %v289 = vadd.f32 %v211, %v288
        %290 = vmatmul.f32.gmra.mxu0 %v236
        %v291 = vpop.f32.mrf.mxu0
        %v292 = vadd.f32 %v211, %v291
        %293 = vmatmul.f32.gmra.mxu0 %v239
        %v294 = vpop.f32.mrf.mxu0
        %v295 = vadd.f32 %v211, %v294
        %296 = vmatmul.f32.gmra.mxu0 %v242
        %v297 = vpop.f32.mrf.mxu0
        %v298 = vadd.f32 %v211, %v297
        %299 = vmatmul.f32.gmra.mxu0 %v245
        %v300 = vpop.f32.mrf.mxu0
        %v301 = vadd.f32 %v211, %v300
        %302 = vmatmul.f32.gmra.mxu0 %v248
        %v303 = vpop.f32.mrf.mxu0
        %v304 = vadd.f32 %v211, %v303
        %305 = vmatmul.f32.gmra.mxu0 %v251
        %v306 = vpop.f32.mrf.mxu0
        %v307 = vadd.f32 %v211, %v306
        %308 = vdwg.mxu0
        %vm309 = vcmask 64512
        %310 = vst.msk [vmem:[%s172] sm:$0xff] %vm309, %v271
        %311 = vst.msk [vmem:[%s172 + $0x8] sm:$0xff] %vm309, %v274
        %312 = vst.msk [vmem:[%s172 + $0x10] sm:$0xff] %vm309, %v277
        %313 = vst.msk [vmem:[%s172 + $0x18] sm:$0xff] %vm309, %v280
        %314 = vst.msk [vmem:[%s172 + $0x20] sm:$0xff] %vm309, %v283
        %315 = vst.msk [vmem:[%s172 + $0x28] sm:$0xff] %vm309, %v286
        %316 = vst.msk [vmem:[%s172 + $0x30] sm:$0xff] %vm309, %v289
        %317 = vst.msk [vmem:[%s172 + $0x38] sm:$0xff] %vm309, %v292
        %318 = vst.msk [vmem:[%s172 + $0x40] sm:$0xff] %vm309, %v295
        %319 = vst.msk [vmem:[%s172 + $0x48] sm:$0xff] %vm309, %v298
        %320 = vst.msk [vmem:[%s172 + $0x50] sm:$0xff] %vm309, %v301
        %321 = vst.msk [vmem:[%s172 + $0x58] sm:$0xff] %vm309, %v304
        %322 = vst.msk [vmem:[%s172 + $0x60] sm:$0xff] %vm309, %v307
        %s323 = sand.u32 %s90, 1
        %s324 = sand.u32 %s90, 1
        %s325 = smul.addr %s324, 104
        %s326 = scalar_lea.vmem [#allocation2], %s325
        // Predicated region
        $region33: #{tpu_custom_call.1} parent=31 // pred_check
          %p327 = pneg %p100
        $region34: #{tpu_custom_call.1} parent=31 // pred_check_branch
          %329 = sbr.rel (%p327) target = $region36
        $region35: #{tpu_custom_call.1} parent=31 // pred_region
          %s330 = smul.u32 13, %s14
          %s331 = ssub.s32 25, %s330
          %p332 = scmp.lt.s32.totalorder %s331, 13
          %s333 = scalar_select %p332, %s331, 13
          %s334 = smul.u32 8, %s333
          %p335 = scmp.ne.s32.totalorder 0, %s334
          %s336 = smul.addr %s330, 8
          %s337 = scalar_lea.vmem %s3, %s336
          // Predicated region
          $region37: #{tpu_custom_call.1} parent=35 // pred_check
            %p338 = pneg %p335
          $region38: #{tpu_custom_call.1} parent=35 // pred_check_branch
            %340 = sbr.rel (%p338) target = $region40
          $region39: #{tpu_custom_call.1} parent=35 // pred_region
            // Predicated region
            $region41: #{tpu_custom_call.1} parent=39 // pred_check
              _
            $region42: #{tpu_custom_call.1} parent=39 // pred_check_branch
              %342 = sbr.rel (0) target = $region44
            $region43: #{tpu_custom_call.1} parent=39 // pred_region
              // Predicated region
              $region63: #{tpu_custom_call.1} parent=43 // pred_check
                _
              $region64: #{tpu_custom_call.1} parent=43 // pred_check_branch
                %417 = sbr.rel (0) target = $region66
              $region65: #{tpu_custom_call.1} parent=43 // pred_region
                %s418 = sdiv.u32.pop %s333, 13
                %s419 = srem.u32.pop %s333, 13
                // While loop
                $region67: #{tpu_custom_call.1} parent=65 // loop_pre_header
                  _
                $region68: #{tpu_custom_call.1} parent=65 // loop_header
                  %s421 = sphi 0, %s423
                  %p422 = scmp.ge.s32.totalorder %s421, %s418
                  %s426 = sphi 0, %s457
                  %s427 = sphi %s326, %s460
                  %s428 = sphi %s337, %s461
                $region69: #{tpu_custom_call.1} parent=65 // loop_header_branch
                  %425 = sbr.rel (%p422) target = $region73
                $region70: #{tpu_custom_call.1} parent=65 // loop_body
                  %v429 = vld [vmem:[%s427] sm:$0xff]
                  %430 = vst [vmem:[%s428] sm:$0xff] %v429
                  %v431 = vld [vmem:[%s427 + $0x8] sm:$0xff]
                  %432 = vst [vmem:[%s428 + $0x8] sm:$0xff] %v431
                  %v433 = vld [vmem:[%s427 + $0x10] sm:$0xff]
                  %434 = vst [vmem:[%s428 + $0x10] sm:$0xff] %v433
                  %v435 = vld [vmem:[%s427 + $0x18] sm:$0xff]
                  %436 = vst [vmem:[%s428 + $0x18] sm:$0xff] %v435
                  %v437 = vld [vmem:[%s427 + $0x20] sm:$0xff]
                  %438 = vst [vmem:[%s428 + $0x20] sm:$0xff] %v437
                  %v439 = vld [vmem:[%s427 + $0x28] sm:$0xff]
                  %440 = vst [vmem:[%s428 + $0x28] sm:$0xff] %v439
                  %v441 = vld [vmem:[%s427 + $0x30] sm:$0xff]
                  %442 = vst [vmem:[%s428 + $0x30] sm:$0xff] %v441
                  %v443 = vld [vmem:[%s427 + $0x38] sm:$0xff]
                  %444 = vst [vmem:[%s428 + $0x38] sm:$0xff] %v443
                  %v445 = vld [vmem:[%s427 + $0x40] sm:$0xff]
                  %446 = vst [vmem:[%s428 + $0x40] sm:$0xff] %v445
                  %v447 = vld [vmem:[%s427 + $0x48] sm:$0xff]
                  %448 = vst [vmem:[%s428 + $0x48] sm:$0xff] %v447
                  %v449 = vld [vmem:[%s427 + $0x50] sm:$0xff]
                  %450 = vst [vmem:[%s428 + $0x50] sm:$0xff] %v449
                  %v451 = vld [vmem:[%s427 + $0x58] sm:$0xff]
                  %452 = vst [vmem:[%s428 + $0x58] sm:$0xff] %v451
                  %v453 = vld [vmem:[%s427 + $0x60] sm:$0xff]
                  %454 = vst [vmem:[%s428 + $0x60] sm:$0xff] %v453
                  %s455 = sadd.s32 1, %s426
                  %p456 = scmp.ge.s32.totalorder %s455, %s418
                  %s457 = scalar_select %p456, 0, %s455
                  %s458 = smul.u32 %s457, 104
                  %s459 = smul.u32 %s457, 104
                  %s460 = scalar_lea.vmem %s326, %s458 [#allocation2]
                  %s461 = scalar_lea.vmem %s337, %s459
                $region71: #{tpu_custom_call.1} parent=65 // loop_footer
                  %s423 = sadd.s32 %s421, 1
                $region72: #{tpu_custom_call.1} parent=65 // loop_footer_branch
                  %420 = sbr.rel target = $region68
                $region73: #{tpu_custom_call.1} parent=65 // loop_exit
                  _
                %s462 = sdiv.u32.pop %s333, 13
                %s463 = srem.u32.pop %s333, 13
                %s464 = smul.u32 %s462, 13
                %s465 = smul.u32 8, %s464
                %s466 = scalar_lea.vmem %s326, %s465 [#allocation2]
                %s467 = smul.u32 8, %s464
                %s468 = scalar_lea.vmem %s337, %s467
                // While loop
                $region74: #{tpu_custom_call.1} parent=65 // loop_pre_header
                  _
                $region75: #{tpu_custom_call.1} parent=65 // loop_header
                  %s470 = sphi 0, %s472
                  %p471 = scmp.ge.s32.totalorder %s470, %s463
                  %s475 = sphi 0, %s482
                  %s476 = sphi %s466, %s485
                  %s477 = sphi %s468, %s486
                $region76: #{tpu_custom_call.1} parent=65 // loop_header_branch
                  %474 = sbr.rel (%p471) target = $region80
                $region77: #{tpu_custom_call.1} parent=65 // loop_body
                  %v478 = vld [vmem:[%s476] sm:$0xff]
                  %479 = vst [vmem:[%s477] sm:$0xff] %v478
                  %s480 = sadd.s32 1, %s475
                  %p481 = scmp.ge.s32.totalorder %s480, %s463
                  %s482 = scalar_select %p481, 0, %s480
                  %s483 = smul.u32 %s482, 8
                  %s484 = smul.u32 %s482, 8
                  %s485 = scalar_lea.vmem %s466, %s483 [#allocation2]
                  %s486 = scalar_lea.vmem %s468, %s484
                $region78: #{tpu_custom_call.1} parent=65 // loop_footer
                  %s472 = sadd.s32 %s470, 1
                $region79: #{tpu_custom_call.1} parent=65 // loop_footer_branch
                  %469 = sbr.rel target = $region75
                $region80: #{tpu_custom_call.1} parent=65 // loop_exit
                  _
              $region66: #{tpu_custom_call.1} parent=43 // pred_fallthru
                _
              // Predicated region
              $region81: #{tpu_custom_call.1} parent=43 // pred_check
                _
              $region82: #{tpu_custom_call.1} parent=43 // pred_check_branch
                %488 = sbr.rel target = $region84
              $region83: #{tpu_custom_call.1} parent=43 // pred_region
                _
              $region84: #{tpu_custom_call.1} parent=43 // pred_fallthru
                _
            $region44: #{tpu_custom_call.1} parent=39 // pred_fallthru
              _
            // Predicated region
            $region45: #{tpu_custom_call.1} parent=39 // pred_check
              _
            $region46: #{tpu_custom_call.1} parent=39 // pred_check_branch
              %344 = sbr.rel target = $region48
            $region47: #{tpu_custom_call.1} parent=39 // pred_region
              %s346 = ssub.s32 256, 1
              %s347 = sdiv.u32.pop %s333, 13
              %s348 = srem.u32.pop %s333, 13
              // While loop
              $region49: #{tpu_custom_call.1} parent=47 // loop_pre_header
                _
              $region50: #{tpu_custom_call.1} parent=47 // loop_header
                %s350 = sphi 0, %s352
                %p351 = scmp.ge.s32.totalorder %s350, %s347
                %s355 = sphi 0, %s386
                %s356 = sphi %s326, %s389
                %s357 = sphi %s337, %s390
              $region51: #{tpu_custom_call.1} parent=47 // loop_header_branch
                %354 = sbr.rel (%p351) target = $region55
              $region52: #{tpu_custom_call.1} parent=47 // loop_body
                %v358 = vld [vmem:[%s356] sm:%s346]
                %359 = vst [vmem:[%s357] sm:%s346] %v358
                %v360 = vld [vmem:[%s356 + $0x8] sm:%s346]
                %361 = vst [vmem:[%s357 + $0x8] sm:%s346] %v360
                %v362 = vld [vmem:[%s356 + $0x10] sm:%s346]
                %363 = vst [vmem:[%s357 + $0x10] sm:%s346] %v362
                %v364 = vld [vmem:[%s356 + $0x18] sm:%s346]
                %365 = vst [vmem:[%s357 + $0x18] sm:%s346] %v364
                %v366 = vld [vmem:[%s356 + $0x20] sm:%s346]
                %367 = vst [vmem:[%s357 + $0x20] sm:%s346] %v366
                %v368 = vld [vmem:[%s356 + $0x28] sm:%s346]
                %369 = vst [vmem:[%s357 + $0x28] sm:%s346] %v368
                %v370 = vld [vmem:[%s356 + $0x30] sm:%s346]
                %371 = vst [vmem:[%s357 + $0x30] sm:%s346] %v370
                %v372 = vld [vmem:[%s356 + $0x38] sm:%s346]
                %373 = vst [vmem:[%s357 + $0x38] sm:%s346] %v372
                %v374 = vld [vmem:[%s356 + $0x40] sm:%s346]
                %375 = vst [vmem:[%s357 + $0x40] sm:%s346] %v374
                %v376 = vld [vmem:[%s356 + $0x48] sm:%s346]
                %377 = vst [vmem:[%s357 + $0x48] sm:%s346] %v376
                %v378 = vld [vmem:[%s356 + $0x50] sm:%s346]
                %379 = vst [vmem:[%s357 + $0x50] sm:%s346] %v378
                %v380 = vld [vmem:[%s356 + $0x58] sm:%s346]
                %381 = vst [vmem:[%s357 + $0x58] sm:%s346] %v380
                %v382 = vld [vmem:[%s356 + $0x60] sm:%s346]
                %383 = vst [vmem:[%s357 + $0x60] sm:%s346] %v382
                %s384 = sadd.s32 1, %s355
                %p385 = scmp.ge.s32.totalorder %s384, %s347
                %s386 = scalar_select %p385, 0, %s384
                %s387 = smul.u32 %s386, 104
                %s388 = smul.u32 %s386, 104
                %s389 = scalar_lea.vmem %s326, %s387 [#allocation2]
                %s390 = scalar_lea.vmem %s337, %s388
              $region53: #{tpu_custom_call.1} parent=47 // loop_footer
                %s352 = sadd.s32 %s350, 1
              $region54: #{tpu_custom_call.1} parent=47 // loop_footer_branch
                %349 = sbr.rel target = $region50
              $region55: #{tpu_custom_call.1} parent=47 // loop_exit
                _
              %s391 = sdiv.u32.pop %s333, 13
              %s392 = srem.u32.pop %s333, 13
              %s393 = smul.u32 %s391, 13
              %s394 = smul.u32 8, %s393
              %s395 = scalar_lea.vmem %s326, %s394 [#allocation2]
              %s396 = smul.u32 8, %s393
              %s397 = scalar_lea.vmem %s337, %s396
              // While loop
              $region56: #{tpu_custom_call.1} parent=47 // loop_pre_header
                _
              $region57: #{tpu_custom_call.1} parent=47 // loop_header
                %s399 = sphi 0, %s401
                %p400 = scmp.ge.s32.totalorder %s399, %s392
                %s404 = sphi 0, %s411
                %s405 = sphi %s395, %s414
                %s406 = sphi %s397, %s415
              $region58: #{tpu_custom_call.1} parent=47 // loop_header_branch
                %403 = sbr.rel (%p400) target = $region62
              $region59: #{tpu_custom_call.1} parent=47 // loop_body
                %v407 = vld [vmem:[%s405] sm:%s346]
                %408 = vst [vmem:[%s406] sm:%s346] %v407
                %s409 = sadd.s32 1, %s404
                %p410 = scmp.ge.s32.totalorder %s409, %s392
                %s411 = scalar_select %p410, 0, %s409
                %s412 = smul.u32 %s411, 8
                %s413 = smul.u32 %s411, 8
                %s414 = scalar_lea.vmem %s395, %s412 [#allocation2]
                %s415 = scalar_lea.vmem %s397, %s413
              $region60: #{tpu_custom_call.1} parent=47 // loop_footer
                %s401 = sadd.s32 %s399, 1
              $region61: #{tpu_custom_call.1} parent=47 // loop_footer_branch
                %398 = sbr.rel target = $region57
              $region62: #{tpu_custom_call.1} parent=47 // loop_exit
                _
            $region48: #{tpu_custom_call.1} parent=39 // pred_fallthru
              _
          $region40: #{tpu_custom_call.1} parent=35 // pred_fallthru
            _
          %489 = vnop
        $region36: #{tpu_custom_call.1} parent=31 // pred_fallthru
          _
      $region32: #{tpu_custom_call.1} parent=5 // pred_fallthru
        _
      %p490 = scmp.le.s32.totalorder 2, %s9
      // Predicated region
      $region85: #{tpu_custom_call.1} parent=5 // pred_check
        %p491 = pneg %p490
      $region86: #{tpu_custom_call.1} parent=5 // pred_check_branch
        %493 = sbr.rel (%p491) target = $region88
      $region87: #{tpu_custom_call.1} parent=5 // pred_region
        %s494 = ssub.s32 %s9, 2
        // Predicated region
        $region89: #{tpu_custom_call.1} parent=87 // pred_check
          %p495 = pneg %p106
        $region90: #{tpu_custom_call.1} parent=87 // pred_check_branch
          %497 = sbr.rel (%p495) target = $region92
        $region91: #{tpu_custom_call.1} parent=87 // pred_region
          %s498 = sand.u32 %s91, 1
          %s499 = sand.u32 %s91, 1
          %s500 = smul.addr %s499, 104
          %s501 = scalar_lea.vmem [#allocation2], %s500
        $region92: #{tpu_custom_call.1} parent=87 // pred_fallthru
          _
      $region88: #{tpu_custom_call.1} parent=5 // pred_fallthru
        _
    $region6: #{tpu_custom_call.1} parent=1 // loop_footer
      %s13 = sadd.s32 1, %s9
    $region7: #{tpu_custom_call.1} parent=1 // loop_footer_branch
      %8 = sbr.rel target = $region3
    $region8: #{tpu_custom_call.1} parent=1 // loop_exit
      _

</llo_original>
